<compile_context>
chip_gen: v6e
topology: v6e:2x2x1
jax: 0.10.0
libtpu: 0.0.40
codegen_flags: <defaults>
</compile_context>

<pallas_src>
import jax
import jax.numpy as jnp
from jax.experimental import pallas as pl
from jax.experimental.pallas import tpu as pltpu


# ---------------------------------------------------------------------------
# Pallas kernel: fused 3-layer MLP over block-diagonally packed field weights
# ---------------------------------------------------------------------------
def _attr_decoder_kernel(x_ref, w1_ref, b1_ref, w2_ref, b2_ref,
                         wd_ref, bd_ref, o_ref):
    x = x_ref[...]                                         # (tm, F*din), compute dtype

    # Layer 1 (block-diag MultiLinear) + bias (f32) + LeakyReLU(0.01) in f32.
    # max(h, 0.01*h) == LeakyReLU(0.01) and lowers to a single vmax (no select).
    h = jnp.dot(x, w1_ref[...], preferred_element_type=jnp.float32) + b1_ref[...]
    h = jnp.maximum(h, 0.01 * h)

    # Layer 2 (block-diag MultiLinear) + bias + LeakyReLU(0.01)
    h = jnp.dot(h.astype(w2_ref.dtype), w2_ref[...],
                preferred_element_type=jnp.float32) + b2_ref[...]
    h = jnp.maximum(h, 0.01 * h)

    # Packed per-field distribution-decoder linears (all params concatenated)
    out = jnp.dot(h.astype(wd_ref.dtype), wd_ref[...],
                  preferred_element_type=jnp.float32) + bd_ref[...]
    o_ref[...] = out.astype(o_ref.dtype)


def _block_diag(w):
    """(n_field, d_in, d_out) -> block-diagonal (n_field*d_in, n_field*d_out)."""
    n_field, d_in, d_out = w.shape
    eye = jnp.eye(n_field, dtype=w.dtype)
    bd = jnp.einsum("fg,fij->figj", eye, w)                # (F, d_in, F, d_out)
    return bd.reshape(n_field * d_in, n_field * d_out)


def _pick_tile_m(M, Din, Dh, Dout, itemsize, *, cap=4096,
                 vmem_budget=20 * 1024 * 1024):
    """Largest row tile (multiple of 8, <= cap) that keeps pipelined buffers
    (double-buffered x/out tiles + two f32 intermediates) under vmem_budget."""
    per_row = 2 * (Din + Dout) * itemsize + 2 * Dh * 4
    tm = min(cap, max(8, (vmem_budget // per_row) // 8 * 8))
    return M if M <= tm else tm


def attribute_decoder_forward(x, params, fieldnames, param_sizes, *,
                              compute_dtype=None, tile_m=4096):
    """x: (B, n_obj, n_field, dim_in)  ->  {field: {param: (B, n_obj, dp)}}"""
    if x.shape[0] == 0:
        raise ValueError("The input includes no attribute.")

    B, n_obj, n_field, dim_in = x.shape
    assert n_field == len(fieldnames)
    dim_hidden = params["w1"].shape[-1]
    dim_out = params["wd"].shape[-1]            # sum of param_sizes (uniform per field)

    M = B * n_obj
    Din, Dh, Dout = n_field * dim_in, n_field * dim_hidden, n_field * dim_out
    cdt = compute_dtype if compute_dtype is not None else x.dtype

    # Block-diagonal packing: per-field linears become one matmul per layer.
    w1 = _block_diag(params["w1"]).astype(cdt)
    w2 = _block_diag(params["w2"]).astype(cdt)
    wd = _block_diag(params["wd"]).astype(cdt)
    # Biases stay f32: elementwise epilogue is done in f32 on all generations.
    b1 = params["b1"][:, 0].reshape(1, Dh).astype(jnp.float32)
    b2 = params["b2"][:, 0].reshape(1, Dh).astype(jnp.float32)
    bd = params["bd"][:, 0].reshape(1, Dout).astype(jnp.float32)

    # Native-layout read: merging contiguous dims is a free view (no HBM pass).
    x2 = x.reshape(M, Din).astype(cdt)

    itemsize = jnp.dtype(cdt).itemsize
    tm = _pick_tile_m(M, Din, Dh, Dout, itemsize, cap=tile_m)
    grid = (pl.cdiv(M, tm),)

    weight_bytes = (w1.size + w2.size + wd.size) * itemsize + (Dh + Dh + Dout) * 4
    cost = pl.CostEstimate(
        flops=int(2 * M * (Din * Dh + Dh * Dh + Dh * Dout)),
        transcendentals=0,
        bytes_accessed=int(M * Din * itemsize + M * Dout * x.dtype.itemsize
                           + weight_bytes),
    )

    out = pl.pallas_call(
        _attr_decoder_kernel,
        out_shape=jax.ShapeDtypeStruct((M, Dout), x.dtype),
        grid=grid,
        in_specs=[
            pl.BlockSpec((tm, Din), lambda m: (m, 0)),
            pl.BlockSpec((Din, Dh), lambda m: (0, 0)),    # constant index_map:
            pl.BlockSpec((1, Dh),   lambda m: (0, 0)),    # weights/biases stay
            pl.BlockSpec((Dh, Dh),  lambda m: (0, 0)),    # VMEM-resident across
            pl.BlockSpec((1, Dh),   lambda m: (0, 0)),    # all M steps
            pl.BlockSpec((Dh, Dout), lambda m: (0, 0)),
            pl.BlockSpec((1, Dout), lambda m: (0, 0)),
        ],
        out_specs=pl.BlockSpec((tm, Dout), lambda m: (m, 0)),
        compiler_params=pltpu.CompilerParams(
            dimension_semantics=("parallel",),            # M tiles -> both TCs on v7x
            vmem_limit_bytes=32 * 1024 * 1024,            # safe on v5e/v6e/v7x
        ),
        cost_estimate=cost,
    )(x2, w1, b1, w2, b2, wd, bd)

    # Unpack packed slab: (M, F*dim_out) -> {field: {param: (B, n_obj, dp)}}
    o = out.reshape(B, n_obj, n_field, dim_out)
    result = {}
    for i, fname in enumerate(fieldnames):
        d, off = {}, 0
        for pname, dp in param_sizes.items():
            d[pname] = o[:, :, i, off:off + dp]
            off += dp
        result[fname] = d
    return result


# ---------------------------------------------------------------------------
# Pure-JAX reference (same math, no Pallas) for a correctness check
# ---------------------------------------------------------------------------
def reference_forward(x, params, fieldnames, param_sizes):
    h = jnp.einsum("bofi,fih->bofh", x, params["w1"]) + params["b1"][:, 0]
    h = jnp.where(h > 0, h, 0.01 * h)
    h = jnp.einsum("bofh,fhk->bofk", h, params["w2"]) + params["b2"][:, 0]
    h = jnp.where(h > 0, h, 0.01 * h)
    o = jnp.einsum("bofh,fhp->bofp", h, params["wd"]) + params["bd"][:, 0]
    out = {}
    for i, fname in enumerate(fieldnames):
        d, off = {}, 0
        for pname, dp in param_sizes.items():
            d[pname] = o[:, :, i, off:off + dp]
            off += dp
        out[fname] = d
    return out


# ---------------------------------------------------------------------------
# Deterministic parameter construction (synthetic, no checkpoint)
# ---------------------------------------------------------------------------
def init_params(key, n_field, dim_in, dim_hidden, dim_out, dtype=jnp.float32):
    ks = jax.random.split(key, 6)
    s = lambda fan_in: 1.0 / jnp.sqrt(fan_in)
    return {
        # MultiLinear.auto([n_field], dim_in, dim_hidden)
        "w1": jax.random.uniform(ks[0], (n_field, dim_in, dim_hidden),
                                 dtype, -s(dim_in), s(dim_in)),
        "b1": jax.random.uniform(ks[1], (n_field, 1, dim_hidden),
                                 dtype, -s(dim_in), s(dim_in)),
        # MultiLinear.auto([n_field], dim_hidden, dim_hidden)
        "w2": jax.random.uniform(ks[2], (n_field, dim_hidden, dim_hidden),
                                 dtype, -s(dim_hidden), s(dim_hidden)),
        "b2": jax.random.uniform(ks[3], (n_field, 1, dim_hidden),
                                 dtype, -s(dim_hidden), s(dim_hidden)),
        # per-field DistributionDecoder sub-linears, packed along output dim
        # (columns = concat of each param-decoder's weights, per field)
        "wd": jax.random.uniform(ks[4], (n_field, dim_hidden, dim_out),
                                 dtype, -s(dim_hidden), s(dim_hidden)),
        "bd": jax.random.uniform(ks[5], (n_field, 1, dim_out),
                                 dtype, -s(dim_hidden), s(dim_hidden)),
    }


if __name__ == "__main__":
    # Small, module-consistent shapes
    B, n_obj, dim_in, dim_hidden = 2, 3, 16, 32
    fieldnames = ["position", "velocity", "size"]          # n_field_state = 3
    param_sizes = {"mean": 4, "scale": 4}                  # e.g. Normal ptype
    n_field = len(fieldnames)
    dim_out = sum(param_sizes.values())

    key = jax.random.PRNGKey(0)
    k_x, k_p = jax.random.split(key)
    x = jax.random.normal(k_x, (B, n_obj, n_field, dim_in), jnp.float32)
    params = init_params(k_p, n_field, dim_in, dim_hidden, dim_out)

    ref = reference_forward(x, params, fieldnames, param_sizes)

    # f32 compute path
    out = attribute_decoder_forward(x, params, fieldnames, param_sizes)
    out = jax.block_until_ready(out)
    for fname in fieldnames:
        for pname, dp in param_sizes.items():
            assert out[fname][pname].shape == (B, n_obj, dp)
            assert jnp.allclose(out[fname][pname], ref[fname][pname],
                                atol=1e-5, rtol=1e-5)

    # bf16 compute path (recommended at scale on v6e/v7x): bf16 MXU operands,
    # f32 accumulation, f32 elementwise epilogue.
    out_bf16 = attribute_decoder_forward(x, params, fieldnames, param_sizes,
                                         compute_dtype=jnp.bfloat16)
    out_bf16 = jax.block_until_ready(out_bf16)
    for fname in fieldnames:
        for pname in param_sizes:
            assert jnp.allclose(out_bf16[fname][pname], ref[fname][pname],
                                atol=5e-2, rtol=5e-2)

    print("KERNEL_OK")
</pallas_src>

<mosaic_0001>
module attributes {stable_mosaic.version = 11 : i64} {
  func.func @_attr_decoder_kernel(%arg0: i32, %arg1: memref<6x48xf32, #tpu.memory_space<vmem>>, %arg2: memref<48x96xf32, #tpu.memory_space<vmem>>, %arg3: memref<1x96xf32, #tpu.memory_space<vmem>>, %arg4: memref<96x96xf32, #tpu.memory_space<vmem>>, %arg5: memref<1x96xf32, #tpu.memory_space<vmem>>, %arg6: memref<96x24xf32, #tpu.memory_space<vmem>>, %arg7: memref<1x24xf32, #tpu.memory_space<vmem>>, %arg8: memref<6x24xf32, #tpu.memory_space<vmem>>) attributes {dimension_semantics = [#tpu.dimension_semantics<parallel>], iteration_bounds = array<i64: 1>, scalar_prefetch = 0 : i64, scratch_operands = 0 : i64, tpu.core_type = #tpu.core_type<tc>, window_params = [{transform_indices = @transform_0, window_bounds = array<i64: 6, 48>}, {pipeline_mode = #tpu.pipeline_mode<synchronous>, transform_indices = @transform_1, window_bounds = array<i64: 48, 96>}, {pipeline_mode = #tpu.pipeline_mode<synchronous>, transform_indices = @transform_2, window_bounds = array<i64: 1, 96>}, {pipeline_mode = #tpu.pipeline_mode<synchronous>, transform_indices = @transform_3, window_bounds = array<i64: 96, 96>}, {pipeline_mode = #tpu.pipeline_mode<synchronous>, transform_indices = @transform_4, window_bounds = array<i64: 1, 96>}, {pipeline_mode = #tpu.pipeline_mode<synchronous>, transform_indices = @transform_5, window_bounds = array<i64: 96, 24>}, {pipeline_mode = #tpu.pipeline_mode<synchronous>, transform_indices = @transform_6, window_bounds = array<i64: 1, 24>}, {transform_indices = @transform_7, window_bounds = array<i64: 6, 24>}]} {
    %c0 = arith.constant 0 : index
    %c0_0 = arith.constant 0 : index
    %0 = vector.load %arg1[%c0, %c0_0] : memref<6x48xf32, #tpu.memory_space<vmem>>, vector<6x48xf32>
    %c0_1 = arith.constant 0 : index
    %c0_2 = arith.constant 0 : index
    %1 = vector.load %arg2[%c0_1, %c0_2] : memref<48x96xf32, #tpu.memory_space<vmem>>, vector<48x96xf32>
    %cst = arith.constant dense<0.000000e+00> : vector<6x96xf32>
    %2 = tpu.matmul %0, %1, %cst {dimension_numbers = #tpu.dot_dimension_numbers<[1], [0], [0], [1], [0, 0, 1, 1], [], []>} : vector<6x48xf32>, vector<48x96xf32>, vector<6x96xf32> -> vector<6x96xf32>
    %c0_3 = arith.constant 0 : index
    %c0_4 = arith.constant 0 : index
    %3 = vector.load %arg3[%c0_3, %c0_4] : memref<1x96xf32, #tpu.memory_space<vmem>>, vector<1x96xf32>
    %4 = vector.broadcast %3 : vector<1x96xf32> to vector<6x96xf32>
    %5 = arith.addf %2, %4 : vector<6x96xf32>
    %cst_5 = arith.constant 0.00999999977 : f32
    %6 = vector.broadcast %cst_5 : f32 to vector<6x96xf32>
    %7 = arith.mulf %6, %5 : vector<6x96xf32>
    %8 = arith.maximumf %5, %7 : vector<6x96xf32>
    %c0_6 = arith.constant 0 : index
    %c0_7 = arith.constant 0 : index
    %9 = vector.load %arg4[%c0_6, %c0_7] : memref<96x96xf32, #tpu.memory_space<vmem>>, vector<96x96xf32>
    %cst_8 = arith.constant dense<0.000000e+00> : vector<6x96xf32>
    %10 = tpu.matmul %8, %9, %cst_8 {dimension_numbers = #tpu.dot_dimension_numbers<[1], [0], [0], [1], [0, 0, 1, 1], [], []>} : vector<6x96xf32>, vector<96x96xf32>, vector<6x96xf32> -> vector<6x96xf32>
    %c0_9 = arith.constant 0 : index
    %c0_10 = arith.constant 0 : index
    %11 = vector.load %arg5[%c0_9, %c0_10] : memref<1x96xf32, #tpu.memory_space<vmem>>, vector<1x96xf32>
    %12 = vector.broadcast %11 : vector<1x96xf32> to vector<6x96xf32>
    %13 = arith.addf %10, %12 : vector<6x96xf32>
    %cst_11 = arith.constant 0.00999999977 : f32
    %14 = vector.broadcast %cst_11 : f32 to vector<6x96xf32>
    %15 = arith.mulf %14, %13 : vector<6x96xf32>
    %16 = arith.maximumf %13, %15 : vector<6x96xf32>
    %c0_12 = arith.constant 0 : index
    %c0_13 = arith.constant 0 : index
    %17 = vector.load %arg6[%c0_12, %c0_13] : memref<96x24xf32, #tpu.memory_space<vmem>>, vector<96x24xf32>
    %cst_14 = arith.constant dense<0.000000e+00> : vector<6x24xf32>
    %18 = tpu.matmul %16, %17, %cst_14 {dimension_numbers = #tpu.dot_dimension_numbers<[1], [0], [0], [1], [0, 0, 1, 1], [], []>} : vector<6x96xf32>, vector<96x24xf32>, vector<6x24xf32> -> vector<6x24xf32>
    %c0_15 = arith.constant 0 : index
    %c0_16 = arith.constant 0 : index
    %19 = vector.load %arg7[%c0_15, %c0_16] : memref<1x24xf32, #tpu.memory_space<vmem>>, vector<1x24xf32>
    %20 = vector.broadcast %19 : vector<1x24xf32> to vector<6x24xf32>
    %21 = arith.addf %18, %20 : vector<6x24xf32>
    %c0_17 = arith.constant 0 : index
    %c0_18 = arith.constant 0 : index
    %22 = vector.load %arg8[%c0_17, %c0_18] : memref<6x24xf32, #tpu.memory_space<vmem>>, vector<6x24xf32>
    tpu.vector_store %arg8[%c0_17, %c0_18], %21 {strides = array<i32>} : memref<6x24xf32, #tpu.memory_space<vmem>>, vector<6x24xf32>,
    return
  }
  func.func @transform_0(%arg0: i32) -> (i32, i32) {
    %c0_i32 = arith.constant 0 : i32
    %c0_i32_0 = arith.constant 0 : i32
    return %arg0, %c0_i32 : i32, i32
  }
  func.func @transform_1(%arg0: i32) -> (i32, i32) {
    %c0_i32 = arith.constant 0 : i32
    %c0_i32_0 = arith.constant 0 : i32
    %c0_i32_1 = arith.constant 0 : i32
    return %c0_i32, %c0_i32_0 : i32, i32
  }
  func.func @transform_2(%arg0: i32) -> (i32, i32) {
    %c0_i32 = arith.constant 0 : i32
    %c0_i32_0 = arith.constant 0 : i32
    %c0_i32_1 = arith.constant 0 : i32
    return %c0_i32, %c0_i32_0 : i32, i32
  }
  func.func @transform_3(%arg0: i32) -> (i32, i32) {
    %c0_i32 = arith.constant 0 : i32
    %c0_i32_0 = arith.constant 0 : i32
    %c0_i32_1 = arith.constant 0 : i32
    return %c0_i32, %c0_i32_0 : i32, i32
  }
  func.func @transform_4(%arg0: i32) -> (i32, i32) {
    %c0_i32 = arith.constant 0 : i32
    %c0_i32_0 = arith.constant 0 : i32
    %c0_i32_1 = arith.constant 0 : i32
    return %c0_i32, %c0_i32_0 : i32, i32
  }
  func.func @transform_5(%arg0: i32) -> (i32, i32) {
    %c0_i32 = arith.constant 0 : i32
    %c0_i32_0 = arith.constant 0 : i32
    %c0_i32_1 = arith.constant 0 : i32
    return %c0_i32, %c0_i32_0 : i32, i32
  }
  func.func @transform_6(%arg0: i32) -> (i32, i32) {
    %c0_i32 = arith.constant 0 : i32
    %c0_i32_0 = arith.constant 0 : i32
    %c0_i32_1 = arith.constant 0 : i32
    return %c0_i32, %c0_i32_0 : i32, i32
  }
  func.func @transform_7(%arg0: i32) -> (i32, i32) {
    %c0_i32 = arith.constant 0 : i32
    %c0_i32_0 = arith.constant 0 : i32
    return %arg0, %c0_i32 : i32, i32
  }
}

</mosaic_0001>

<llo_original>
// kernel: tpu_custom_call.1
$region0: #{tpu_custom_call.1}
  #allocation0 [shape = 'u32[]', space=smem, size = 0x4, offset = 0x4, fixed_abs, tag = 'smem constant byte address 0x4 - core index']
  #allocation1 [shape = 'u32[144,128]{1,0:T(1,128)}', space=vmem, size = 0x12000, scoped, tag = 'internal scratch']
  %s0 = inlined_call_operand.vmem [shape: f32[6,48], index: 0, kind: input, shape index: {}]
  %s1 = inlined_call_operand.hbm [shape: f32[48,96], index: 1, kind: input, shape index: {}]
  %s2 = inlined_call_operand.vmem [shape: f32[1,96], index: 2, kind: input, shape index: {}]
  %s3 = inlined_call_operand.vmem [shape: f32[96,96], index: 3, kind: input, shape index: {}]
  %s4 = inlined_call_operand.vmem [shape: f32[1,96], index: 4, kind: input, shape index: {}]
  %s5 = inlined_call_operand.vmem [shape: f32[96,24], index: 5, kind: input, shape index: {}]
  %s6 = inlined_call_operand.vmem [shape: f32[1,24], index: 6, kind: input, shape index: {}]
  %s7 = inlined_call_operand.hbm [shape: f32[6,24], index: 7, kind: output, shape index: {}]
  %s8 = sld [smem:[#allocation0]]
  $region42: #{tpu_custom_call.1} parent=0
    _
  %s10 = ssub.s32 1, %s8
  %s11 = scalar_select 0, %s10, %s8
  $region1: #{tpu_custom_call.1} parent=0
    #allocation2 [shape = 'u8[24576]{0}', space=vmem, size = 0x6000, scoped, tag = 'input window, operand 1, single buffered']
    #allocation3 [shape = 's32[1]{0}', space=sflag, size = 0x4, scoped, tag = 'scoped memory for tpu_custom_call.1']
    #allocation4 [shape = 's32[1]{0}', space=sflag, size = 0x4, scoped, tag = 'scoped memory for tpu_custom_call.1']
    #allocation5 [shape = 'u8[4096]{0}', space=vmem, size = 0x1000, scoped, tag = 'output window, operand 0, single buffered']
    %12 = vsyncpa [#allocation3], 0
    %13 = vsyncpa [#allocation4], 0
    // Predicated region
    $region2: #{tpu_custom_call.1} parent=1 // pred_check
      _
    $region3: #{tpu_custom_call.1} parent=1 // pred_check_branch
      %15 = sbr.rel (0) target = $region5
    $region4: #{tpu_custom_call.1} parent=1 // pred_region
      _
    $region5: #{tpu_custom_call.1} parent=1 // pred_fallthru
      _
    // Predicated region
    $region6: #{tpu_custom_call.1} parent=1 // pred_check
      _
    $region7: #{tpu_custom_call.1} parent=1 // pred_check_branch
      %17 = sbr.rel (0) target = $region9
    $region8: #{tpu_custom_call.1} parent=1 // pred_region
      %s19 = ssub.s32 768, 768
      %20 = vsyncadd [#allocation3], %s19
      %s21 = sshll.u32 [#allocation2], 4
      %s22 = int_to_ptr.vmem [resolvable:$true] %s21
      %27 = dma.hbm_to_vmem [thread:$0]  %s1, 768, %s22, [#allocation3], 128, 128, 8
    $region9: #{tpu_custom_call.1} parent=1 // pred_fallthru
      _
    // Predicated region
    $region10: #{tpu_custom_call.1} parent=1 // pred_check
      _
    $region11: #{tpu_custom_call.1} parent=1 // pred_check_branch
      %29 = sbr.rel (0) target = $region13
    $region12: #{tpu_custom_call.1} parent=1 // pred_region
      _
    $region13: #{tpu_custom_call.1} parent=1 // pred_fallthru
      _
    // Predicated region
    $region14: #{tpu_custom_call.1} parent=1 // pred_check
      _
    $region15: #{tpu_custom_call.1} parent=1 // pred_check_branch
      %31 = sbr.rel (0) target = $region17
    $region16: #{tpu_custom_call.1} parent=1 // pred_region
      _
    $region17: #{tpu_custom_call.1} parent=1 // pred_fallthru
      _
    // Predicated region
    $region18: #{tpu_custom_call.1} parent=1 // pred_check
      _
    $region19: #{tpu_custom_call.1} parent=1 // pred_check_branch
      %33 = sbr.rel (0) target = $region21
    $region20: #{tpu_custom_call.1} parent=1 // pred_region
      _
    $region21: #{tpu_custom_call.1} parent=1 // pred_fallthru
      _
    // Predicated region
    $region22: #{tpu_custom_call.1} parent=1 // pred_check
      _
    $region23: #{tpu_custom_call.1} parent=1 // pred_check_branch
      %35 = sbr.rel (0) target = $region25
    $region24: #{tpu_custom_call.1} parent=1 // pred_region
      _
    $region25: #{tpu_custom_call.1} parent=1 // pred_fallthru
      _
    // Predicated region
    $region26: #{tpu_custom_call.1} parent=1 // pred_check
      _
    $region27: #{tpu_custom_call.1} parent=1 // pred_check_branch
      %37 = sbr.rel (0) target = $region29
    $region28: #{tpu_custom_call.1} parent=1 // pred_region
      _
    $region29: #{tpu_custom_call.1} parent=1 // pred_fallthru
      _
    // Predicated region
    $region30: #{tpu_custom_call.1} parent=1 // pred_check
      _
    $region31: #{tpu_custom_call.1} parent=1 // pred_check_branch
      %39 = sbr.rel (0) target = $region33
    $region32: #{tpu_custom_call.1} parent=1 // pred_region
      %40 = dma.done [#allocation3], 768
    $region33: #{tpu_custom_call.1} parent=1 // pred_fallthru
      _
    %v41 = vld [vmem:[%s0] sm:$0x3f]
    %v42 = vld [vmem:[#allocation2] sm:$0xff]
    %v43 = vld [vmem:[#allocation2 + $0x8] sm:$0xff]
    %v44 = vld [vmem:[#allocation2 + $0x10] sm:$0xff]
    %v45 = vld [vmem:[#allocation2 + $0x18] sm:$0xff]
    %v46 = vld [vmem:[#allocation2 + $0x20] sm:$0xff]
    %v47 = vld [vmem:[#allocation2 + $0x28] sm:$0xff]
    %v48 = vld [vmem:[%s2] sm:$0x1]
    %v50 = vlaneseq
    %v51 = vshrl.u32 %v50, 7
    %v52 = vsub.s32 0, %v51
    %v53 = vrot.slane %v48, %v52
    %vm55 = vcmask 392192
    %v57 = vsel %vm55, %v41, 0
    %59 = vmatprep.subr.mxu0 0.0
    %60 = vmatpush1.msra.mxu0 0.0
    %61 = vmatprep.subr.mxu0 0.0
    %62 = vmatpush1.msra.mxu0 0.0
    %63 = vmatprep.subr.mxu0 0.0
    %64 = vmatpush1.msra.mxu0 0.0
    %65 = vmatprep.subr.mxu0 0.0
    %66 = vmatpush1.msra.mxu0 0.0
    %67 = vmatprep.subr.mxu0 0.0
    %68 = vmatpush1.msra.mxu0 0.0
    %69 = vmatprep.subr.mxu0 0.0
    %70 = vmatpush1.msra.mxu0 0.0
    %71 = vmatprep.subr.mxu0 0.0
    %72 = vmatpush1.msra.mxu0 0.0
    %73 = vmatprep.subr.mxu0 0.0
    %74 = vmatpush1.msra.mxu0 0.0
    %75 = vmatprep.subr.mxu0 0.0
    %76 = vmatpush1.msra.mxu0 0.0
    %77 = vmatprep.subr.mxu0 0.0
    %78 = vmatpush1.msra.mxu0 0.0
    %79 = vmatprep.subr.mxu0 0.0
    %80 = vmatpush1.msra.mxu0 %v47
    %81 = vmatprep.subr.mxu0 0.0
    %82 = vmatpush1.msra.mxu0 %v46
    %83 = vmatprep.subr.mxu0 0.0
    %84 = vmatpush1.msra.mxu0 %v45
    %85 = vmatprep.subr.mxu0 0.0
    %86 = vmatpush1.msra.mxu0 %v44
    %87 = vmatprep.subr.mxu0 0.0
    %88 = vmatpush1.msra.mxu0 %v43
    %89 = vmatprep.subr.mxu0 0.0
    %90 = vmatpush1.msra.mxu0 %v42
    %91 = vmatprep.subr.mxu0 0.0
    %92 = vmatpush2.msra.mxu0 0.0
    %93 = vmatprep.subr.mxu0 0.0
    %94 = vmatpush2.msra.mxu0 0.0
    %95 = vmatprep.subr.mxu0 0.0
    %96 = vmatpush2.msra.mxu0 0.0
    %97 = vmatprep.subr.mxu0 0.0
    %98 = vmatpush2.msra.mxu0 0.0
    %99 = vmatprep.subr.mxu0 0.0
    %100 = vmatpush2.msra.mxu0 0.0
    %101 = vmatprep.subr.mxu0 0.0
    %102 = vmatpush2.msra.mxu0 0.0
    %103 = vmatprep.subr.mxu0 0.0
    %104 = vmatpush2.msra.mxu0 0.0
    %105 = vmatprep.subr.mxu0 0.0
    %106 = vmatpush2.msra.mxu0 0.0
    %107 = vmatprep.subr.mxu0 0.0
    %108 = vmatpush2.msra.mxu0 0.0
    %109 = vmatprep.subr.mxu0 0.0
    %110 = vmatpush2.msra.mxu0 0.0
    %111 = vmatprep.subr.mxu0 0.0
    %112 = vmatpush2.msra.mxu0 0.0
    %113 = vmatprep.subr.mxu0 0.0
    %114 = vmatpush2.msra.mxu0 0.0
    %115 = vmatprep.subr.mxu0 0.0
    %116 = vmatpush2.msra.mxu0 0.0
    %117 = vmatprep.subr.mxu0 0.0
    %118 = vmatpush2.msra.mxu0 0.0
    %119 = vmatprep.subr.mxu0 0.0
    %120 = vmatpush2.msra.mxu0 0.0
    %121 = vmatprep.subr.mxu0 0.0
    %122 = vmatpush2.msra.mxu0 0.0
    %123 = vmatprep.mubr.f32.mxu0 0.0
    %124 = vmatmul.mubr.f32.gmra.mxu0 %v57
    %v125 = vpop.f32.mrf.mxu0
    %v126 = vadd.f32 %v53, %v125
    %v127 = vpop.f32.mrf.mxu0
    %128 = vdwg.mxu0
    %v129 = vmul.f32 %v126, 0.01
    %v130 = vmax.f32 %v126, %v129
    %v131 = vld [vmem:[%s3] sm:$0xff]
    %v132 = vld [vmem:[%s3 + $0x8] sm:$0xff]
    %v133 = vld [vmem:[%s3 + $0x10] sm:$0xff]
    %v134 = vld [vmem:[%s3 + $0x18] sm:$0xff]
    %v135 = vld [vmem:[%s3 + $0x20] sm:$0xff]
    %v136 = vld [vmem:[%s3 + $0x28] sm:$0xff]
    %v137 = vld [vmem:[%s3 + $0x30] sm:$0xff]
    %v138 = vld [vmem:[%s3 + $0x38] sm:$0xff]
    %v139 = vld [vmem:[%s3 + $0x40] sm:$0xff]
    %v140 = vld [vmem:[%s3 + $0x48] sm:$0xff]
    %v141 = vld [vmem:[%s3 + $0x50] sm:$0xff]
    %v142 = vld [vmem:[%s3 + $0x58] sm:$0xff]
    %v143 = vld [vmem:[%s4] sm:$0x1]
    %v145 = vlaneseq
    %v146 = vshrl.u32 %v145, 7
    %v147 = vsub.s32 0, %v146
    %v148 = vrot.slane %v143, %v147
    %vm150 = vcmask 785408
    %v152 = vsel %vm150, %v130, 0
    %154 = vmatprep.subr.mxu0 0.0
    %155 = vmatpush1.msra.mxu0 0.0
    %156 = vmatprep.subr.mxu0 0.0
    %157 = vmatpush1.msra.mxu0 0.0
    %158 = vmatprep.subr.mxu0 0.0
    %159 = vmatpush1.msra.mxu0 0.0
    %160 = vmatprep.subr.mxu0 0.0
    %161 = vmatpush1.msra.mxu0 0.0
    %162 = vmatprep.subr.mxu0 0.0
    %163 = vmatpush1.msra.mxu0 %v142
    %164 = vmatprep.subr.mxu0 0.0
    %165 = vmatpush1.msra.mxu0 %v141
    %166 = vmatprep.subr.mxu0 0.0
    %167 = vmatpush1.msra.mxu0 %v140
    %168 = vmatprep.subr.mxu0 0.0
    %169 = vmatpush1.msra.mxu0 %v139
    %170 = vmatprep.subr.mxu0 0.0
    %171 = vmatpush1.msra.mxu0 %v138
    %172 = vmatprep.subr.mxu0 0.0
    %173 = vmatpush1.msra.mxu0 %v137
    %174 = vmatprep.subr.mxu0 0.0
    %175 = vmatpush1.msra.mxu0 %v136
    %176 = vmatprep.subr.mxu0 0.0
    %177 = vmatpush1.msra.mxu0 %v135
    %178 = vmatprep.subr.mxu0 0.0
    %179 = vmatpush1.msra.mxu0 %v134
    %180 = vmatprep.subr.mxu0 0.0
    %181 = vmatpush1.msra.mxu0 %v133
    %182 = vmatprep.subr.mxu0 0.0
    %183 = vmatpush1.msra.mxu0 %v132
    %184 = vmatprep.subr.mxu0 0.0
    %185 = vmatpush1.msra.mxu0 %v131
    %186 = vmatprep.subr.mxu0 0.0
    %187 = vmatpush2.msra.mxu0 0.0
    %188 = vmatprep.subr.mxu0 0.0
    %189 = vmatpush2.msra.mxu0 0.0
    %190 = vmatprep.subr.mxu0 0.0
    %191 = vmatpush2.msra.mxu0 0.0
    %192 = vmatprep.subr.mxu0 0.0
    %193 = vmatpush2.msra.mxu0 0.0
    %194 = vmatprep.subr.mxu0 0.0
    %195 = vmatpush2.msra.mxu0 0.0
    %196 = vmatprep.subr.mxu0 0.0
    %197 = vmatpush2.msra.mxu0 0.0
    %198 = vmatprep.subr.mxu0 0.0
    %199 = vmatpush2.msra.mxu0 0.0
    %200 = vmatprep.subr.mxu0 0.0
    %201 = vmatpush2.msra.mxu0 0.0
    %202 = vmatprep.subr.mxu0 0.0
    %203 = vmatpush2.msra.mxu0 0.0
    %204 = vmatprep.subr.mxu0 0.0
    %205 = vmatpush2.msra.mxu0 0.0
    %206 = vmatprep.subr.mxu0 0.0
    %207 = vmatpush2.msra.mxu0 0.0
    %208 = vmatprep.subr.mxu0 0.0
    %209 = vmatpush2.msra.mxu0 0.0
    %210 = vmatprep.subr.mxu0 0.0
    %211 = vmatpush2.msra.mxu0 0.0
    %212 = vmatprep.subr.mxu0 0.0
    %213 = vmatpush2.msra.mxu0 0.0
    %214 = vmatprep.subr.mxu0 0.0
    %215 = vmatpush2.msra.mxu0 0.0
    %216 = vmatprep.subr.mxu0 0.0
    %217 = vmatpush2.msra.mxu0 0.0
    %218 = vmatprep.mubr.f32.mxu0 0.0
    %219 = vmatmul.mubr.f32.gmra.mxu0 %v152
    %v220 = vpop.f32.mrf.mxu0
    %v221 = vadd.f32 %v148, %v220
    %v222 = vpop.f32.mrf.mxu0
    %223 = vdwg.mxu0
    %v224 = vmul.f32 %v221, 0.01
    %v225 = vmax.f32 %v221, %v224
    %v226 = vld [vmem:[%s5] sm:$0xff]
    %v227 = vld [vmem:[%s5 + $0x8] sm:$0xff]
    %v228 = vld [vmem:[%s5 + $0x10] sm:$0xff]
    %v229 = vld [vmem:[%s5 + $0x18] sm:$0xff]
    %v230 = vld [vmem:[%s5 + $0x20] sm:$0xff]
    %v231 = vld [vmem:[%s5 + $0x28] sm:$0xff]
    %v232 = vld [vmem:[%s5 + $0x30] sm:$0xff]
    %v233 = vld [vmem:[%s5 + $0x38] sm:$0xff]
    %v234 = vld [vmem:[%s5 + $0x40] sm:$0xff]
    %v235 = vld [vmem:[%s5 + $0x48] sm:$0xff]
    %v236 = vld [vmem:[%s5 + $0x50] sm:$0xff]
    %v237 = vld [vmem:[%s5 + $0x58] sm:$0xff]
    %v238 = vld [vmem:[%s6] sm:$0x1]
    %v240 = vlaneseq
    %v241 = vshrl.u32 %v240, 7
    %v242 = vsub.s32 0, %v241
    %v243 = vrot.slane %v238, %v242
    %v246 = vsel %vm150, %v225, 0
    %248 = vmatprep.subr.mxu0 0.0
    %249 = vmatpush1.msra.mxu0 0.0
    %250 = vmatprep.subr.mxu0 0.0
    %251 = vmatpush1.msra.mxu0 0.0
    %252 = vmatprep.subr.mxu0 0.0
    %253 = vmatpush1.msra.mxu0 0.0
    %254 = vmatprep.subr.mxu0 0.0
    %255 = vmatpush1.msra.mxu0 0.0
    %256 = vmatprep.subr.mxu0 0.0
    %257 = vmatpush1.msra.mxu0 %v237
    %258 = vmatprep.subr.mxu0 0.0
    %259 = vmatpush1.msra.mxu0 %v236
    %260 = vmatprep.subr.mxu0 0.0
    %261 = vmatpush1.msra.mxu0 %v235
    %262 = vmatprep.subr.mxu0 0.0
    %263 = vmatpush1.msra.mxu0 %v234
    %264 = vmatprep.subr.mxu0 0.0
    %265 = vmatpush1.msra.mxu0 %v233
    %266 = vmatprep.subr.mxu0 0.0
    %267 = vmatpush1.msra.mxu0 %v232
    %268 = vmatprep.subr.mxu0 0.0
    %269 = vmatpush1.msra.mxu0 %v231
    %270 = vmatprep.subr.mxu0 0.0
    %271 = vmatpush1.msra.mxu0 %v230
    %272 = vmatprep.subr.mxu0 0.0
    %273 = vmatpush1.msra.mxu0 %v229
    %274 = vmatprep.subr.mxu0 0.0
    %275 = vmatpush1.msra.mxu0 %v228
    %276 = vmatprep.subr.mxu0 0.0
    %277 = vmatpush1.msra.mxu0 %v227
    %278 = vmatprep.subr.mxu0 0.0
    %279 = vmatpush1.msra.mxu0 %v226
    %280 = vmatprep.subr.mxu0 0.0
    %281 = vmatpush2.msra.mxu0 0.0
    %282 = vmatprep.subr.mxu0 0.0
    %283 = vmatpush2.msra.mxu0 0.0
    %284 = vmatprep.subr.mxu0 0.0
    %285 = vmatpush2.msra.mxu0 0.0
    %286 = vmatprep.subr.mxu0 0.0
    %287 = vmatpush2.msra.mxu0 0.0
    %288 = vmatprep.subr.mxu0 0.0
    %289 = vmatpush2.msra.mxu0 0.0
    %290 = vmatprep.subr.mxu0 0.0
    %291 = vmatpush2.msra.mxu0 0.0
    %292 = vmatprep.subr.mxu0 0.0
    %293 = vmatpush2.msra.mxu0 0.0
    %294 = vmatprep.subr.mxu0 0.0
    %295 = vmatpush2.msra.mxu0 0.0
    %296 = vmatprep.subr.mxu0 0.0
    %297 = vmatpush2.msra.mxu0 0.0
    %298 = vmatprep.subr.mxu0 0.0
    %299 = vmatpush2.msra.mxu0 0.0
    %300 = vmatprep.subr.mxu0 0.0
    %301 = vmatpush2.msra.mxu0 0.0
    %302 = vmatprep.subr.mxu0 0.0
    %303 = vmatpush2.msra.mxu0 0.0
    %304 = vmatprep.subr.mxu0 0.0
    %305 = vmatpush2.msra.mxu0 0.0
    %306 = vmatprep.subr.mxu0 0.0
    %307 = vmatpush2.msra.mxu0 0.0
    %308 = vmatprep.subr.mxu0 0.0
    %309 = vmatpush2.msra.mxu0 0.0
    %310 = vmatprep.subr.mxu0 0.0
    %311 = vmatpush2.msra.mxu0 0.0
    %312 = vmatprep.mubr.f32.mxu0 0.0
    %313 = vmatmul.mubr.f32.gmra.mxu0 %v246
    %v314 = vpop.f32.mrf.mxu0
    %v315 = vadd.f32 %v243, %v314
    %v316 = vpop.f32.mrf.mxu0
    %317 = vdwg.mxu0
    %vm318 = vcmask 193536
    %319 = vst.msk [vmem:[#allocation5] sm:$0x3f] %vm318, %v315
    // Predicated region
    $region34: #{tpu_custom_call.1} parent=1 // pred_check
      _
    $region35: #{tpu_custom_call.1} parent=1 // pred_check_branch
      %321 = sbr.rel (0) target = $region37
    $region36: #{tpu_custom_call.1} parent=1 // pred_region
      %s323 = ssub.s32 128, 128
      %324 = vsyncadd [#allocation4], %s323
      %s326 = sshll.u32 [#allocation5], 4
      %s327 = int_to_ptr.vmem [resolvable:$true] %s326
      %329 = dma.vmem_to_hbm [thread:$0]  %s327, 128, %s7, [#allocation4]
    $region37: #{tpu_custom_call.1} parent=1 // pred_fallthru
      _
    // Predicated region
    $region38: #{tpu_custom_call.1} parent=1 // pred_check
      _
    $region39: #{tpu_custom_call.1} parent=1 // pred_check_branch
      %331 = sbr.rel (0) target = $region41
    $region40: #{tpu_custom_call.1} parent=1 // pred_region
      %332 = dma.done [#allocation4], 128
    $region41: #{tpu_custom_call.1} parent=1 // pred_fallthru
      _
    %333 = vsyncpa [#allocation3], 1
    %334 = vsyncpa [#allocation4], 1

</llo_original>
